<compile_context>
chip_gen: v5e
topology: v5e:2x2
jax: 0.10.0
libtpu: 0.0.40
codegen_flags: <defaults>
</compile_context>

<pallas_src>
from functools import partial

import jax
import jax.numpy as jnp
import numpy as np
from jax.experimental import pallas as pl
from jax.experimental.pallas import tpu as pltpu

_LANE = 128      # lane width (last-dim tiling unit)
_SUBLANE = 8     # f32 sublane tiling unit


def _round_up(x, m):
    return ((x + m - 1) // m) * m


def _gelu_tanh_approx(x):
    # tanh-approx GELU via sigmoid: 0.5 * (1 + tanh(z)) == sigmoid(2 z), so
    # gelu(x) ~= x * sigmoid(2c * (x + 0.044715 x^3)).  One EUP op + ~4 VPU ops.
    # TODO(synk): PyTorch nn.GELU() defaults to the exact erf form; the tanh
    # approximation (max abs deviation ~1e-3) is used for guaranteed Mosaic
    # lowering and is covered by the bf16-matmul tolerance.
    c2 = 2.0 * 0.7978845608028654          # 2 * sqrt(2 / pi)
    z = x * (c2 + (c2 * 0.044715) * (x * x))
    return x * jax.nn.sigmoid(z)


def mlp_kernel(x_ref, w1_ref, b1_ref, w2_ref, b2_ref, o_ref, acc_ref, *, h_chunk):
    """One (TM, Cin) token tile x one H super-tile.

    x_ref : (TM, Cin)      input dtype (bf16 or f32)
    w1_ref: (Cin, Hsup)    bf16          b1_ref: (1, Hsup)  f32
    w2_ref: (Hsup, Cout)   bf16          b2_ref: (1, Cout)  f32
    o_ref : (TM, Cout)     input dtype
    acc_ref: (TM, Cout)    f32 scratch, persists across the H grid axis
    """
    k = pl.program_id(1)

    @pl.when(k == 0)
    def _init():
        acc_ref[...] = jnp.zeros_like(acc_ref)

    # bf16 MXU operands; no-op if the input already streams in as bf16.
    xb = x_ref[...].astype(jnp.bfloat16)

    h_super = w1_ref.shape[1]
    # Static (unrolled) chunk loop over the hidden dim: lets the scheduler
    # overlap chunk c's GELU (VPU/EUP slots) with chunk c+-1's matmuls (MXU)
    # and keeps the f32 intermediate at (TM, h_chunk) instead of (TM, H).
    for c in range(h_super // h_chunk):
        lo, hi = c * h_chunk, (c + 1) * h_chunk        # static slices -> free views
        h = jnp.dot(xb, w1_ref[:, lo:hi],
                    preferred_element_type=jnp.float32)          # (TM, hc) f32
        h = h + b1_ref[:, lo:hi]
        # GELU stays f32 (v5e has no bf16 VPU/EUP).
        # TODO(synk): on v6e/v7x this elementwise block could run in bf16.
        h = _gelu_tanh_approx(h)
        # dropout p=0.0 -> identity
        acc_ref[...] += jnp.dot(h.astype(jnp.bfloat16), w2_ref[lo:hi, :],
                                preferred_element_type=jnp.float32)

    @pl.when(k == pl.num_programs(1) - 1)
    def _finalize():
        # dropout p=0.0 -> identity
        o_ref[...] = (acc_ref[...] + b2_ref[...]).astype(o_ref.dtype)


def prepare_mlp_params(w1, b1, w2, b2):
    """One-time host-side prep (hoisted out of the per-call path).

    Transposes PyTorch (out, in) Linear weights to (in, out), casts the MXU
    operands to bf16, and zero-pads every feature dim to a multiple of 128 so
    all kernel tiles are lane-dense (unmasked vst).  Returns (params, cout).
    """
    w1 = jnp.asarray(w1, jnp.float32)      # (H, Cin)
    w2 = jnp.asarray(w2, jnp.float32)      # (Cout, H)
    b1 = jnp.asarray(b1, jnp.float32)
    b2 = jnp.asarray(b2, jnp.float32)
    hid, cin = w1.shape
    cout = w2.shape[0]
    cin_p, hid_p, cout_p = (_round_up(d, _LANE) for d in (cin, hid, cout))

    w1_t = (jnp.zeros((cin_p, hid_p), jnp.float32)
            .at[:cin, :hid].set(w1.T).astype(jnp.bfloat16))
    w2_t = (jnp.zeros((hid_p, cout_p), jnp.float32)
            .at[:hid, :cout].set(w2.T).astype(jnp.bfloat16))
    b1_r = jnp.zeros((1, hid_p), jnp.float32).at[:, :hid].set(b1)
    b2_r = jnp.zeros((1, cout_p), jnp.float32).at[:, :cout].set(b2)
    return (w1_t, b1_r, w2_t, b2_r), int(cout)


def _usable_vmem_bytes():
    """Generation-aware VMEM cap (~128 MiB v5e/v6e, 64 MiB per-TC on v7x)."""
    try:
        cap = getattr(pltpu.get_tpu_info(), "vmem_capacity_bytes", None)
    except Exception:
        cap = None
    if not cap:
        cap = 64 * 1024 * 1024             # conservative default: v7x per-TC
    return int(cap) * 7 // 8               # headroom for Mosaic-internal scratch


@partial(jax.jit, static_argnames=("out_features", "block_rows"))
def mlp_forward(x, w1_t, b1_r, w2_t, b2_r, *, out_features, block_rows=256):
    """x: (..., Cin).  Returns (..., out_features) in x's dtype."""
    orig_shape = x.shape
    cin = orig_shape[-1]
    cin_p, hid_p = w1_t.shape
    cout_p = w2_t.shape[1]

    x2 = x.reshape(-1, cin)
    if cin_p != cin:                       # lane-pad features (no-op when 128-aligned)
        x2 = jnp.pad(x2, ((0, 0), (0, cin_p - cin)))
    n = x2.shape[0]
    io_bytes = x2.dtype.itemsize           # bf16 input -> half the tile DMA bytes

    # ---- row tile -----------------------------------------------------------
    block_rows = max(_SUBLANE, (block_rows // _SUBLANE) * _SUBLANE)
    if n <= block_rows:
        tm = n                             # single tile == full dim (always legal)
    else:
        tm = block_rows                    # ragged tail handled by boundary masking
    grid_rows = pl.cdiv(n, tm)

    # ---- hidden super-tile / in-kernel chunk, sized against VMEM -------------
    usable = _usable_vmem_bytes()

    def vmem_need(h_sup, h_chk):
        w = 2 * 2 * (cin_p * h_sup + h_sup * cout_p)       # bf16 weight blocks (x2 buffers)
        b = 2 * 4 * (h_sup + cout_p)                        # f32 bias blocks (x2 buffers)
        xo = 2 * tm * (cin_p + cout_p) * io_bytes           # pipelined x / out tiles
        acc = tm * cout_p * 4                               # f32 accumulator scratch
        inter = tm * h_chk * (4 + 2)                        # f32 GELU chunk + bf16 copy
        return w + b + xo + acc + inter

    # TODO(synk): on v7x, single-buffering the constant-index weight specs
    # (pipeline_mode=pl.Buffered(1)) would halve resident-weight VMEM; the
    # budget above conservatively counts both pipeline buffers instead.
    units = hid_p // _LANE
    n_h_tiles = units                      # worst case: 128-wide H tiles streamed
    for cand in range(1, units + 1):
        if units % cand:
            continue
        if vmem_need(hid_p // cand, min(512, hid_p // cand)) <= usable:
            n_h_tiles = cand
            break
    h_super = hid_p // n_h_tiles
    h_chunk = h_super
    for c in range(min(512, h_super), 0, -_LANE):
        if h_super % c == 0:
            h_chunk = c
            break

    vmem_limit = int(max(usable, 32 * 1024 * 1024))

    out = pl.pallas_call(
        partial(mlp_kernel, h_chunk=h_chunk),
        out_shape=jax.ShapeDtypeStruct((n, cout_p), x2.dtype),
        grid=(grid_rows, n_h_tiles),
        in_specs=[
            pl.BlockSpec((tm, cin_p), lambda i, k: (i, 0)),        # x row tile (pipelined)
            pl.BlockSpec((cin_p, h_super), lambda i, k: (0, k)),   # W1 (resident if n_h_tiles==1)
            pl.BlockSpec((1, h_super), lambda i, k: (0, k)),       # b1
            pl.BlockSpec((h_super, cout_p), lambda i, k: (k, 0)),  # W2
            pl.BlockSpec((1, cout_p), lambda i, k: (0, 0)),        # b2
        ],
        out_specs=pl.BlockSpec((tm, cout_p), lambda i, k: (i, 0)),
        scratch_shapes=[pltpu.VMEM((tm, cout_p), jnp.float32)],
        compiler_params=pltpu.CompilerParams(
            dimension_semantics=("parallel", "arbitrary"),
            vmem_limit_bytes=vmem_limit,
        ),
    )(x2, w1_t, b1_r, w2_t, b2_r)

    if cout_p != out_features:
        out = out[:, :out_features]
    return out.reshape(*orig_shape[:-1], out_features)


def mlp_reference(x, w1, b1, w2, b2):
    """Pure-JAX reference matching the PyTorch module (exact-erf GELU, f32)."""
    h = x @ w1.T + b1
    h = jax.nn.gelu(h, approximate=False)
    return h @ w2.T + b2


if __name__ == "__main__":
    B, SEQ, CIN, HID, COUT = 2, 16, 32, 64, 32

    key = jax.random.PRNGKey(0)
    k_x, k_w1, k_b1, k_w2, k_b2 = jax.random.split(key, 5)

    x = jax.random.normal(k_x, (B, SEQ, CIN), dtype=jnp.float32)

    # PyTorch nn.Linear weight layout: (out_features, in_features).
    w1 = 0.1 * jax.random.normal(k_w1, (HID, CIN), dtype=jnp.float32)
    b1 = 0.1 * jax.random.normal(k_b1, (HID,), dtype=jnp.float32)
    w2 = 0.1 * jax.random.normal(k_w2, (COUT, HID), dtype=jnp.float32)
    b2 = 0.1 * jax.random.normal(k_b2, (COUT,), dtype=jnp.float32)

    # Host-side param prep (transpose / bf16 cast / 128-lane padding) done once.
    params, out_features = prepare_mlp_params(w1, b1, w2, b2)

    out = mlp_forward(x, *params, out_features=out_features)
    out = jax.block_until_ready(out)

    ref = mlp_reference(x, w1, b1, w2, b2)
    np.testing.assert_allclose(np.asarray(out), np.asarray(ref),
                               rtol=2e-2, atol=2e-2)

    print("KERNEL_OK")
</pallas_src>

<mosaic_0001>
module attributes {stable_mosaic.version = 11 : i64} {
  func.func @mlp_kernel(%arg0: i32, %arg1: i32, %arg2: memref<32x128xf32, #tpu.memory_space<vmem>>, %arg3: memref<128x128xbf16, #tpu.memory_space<vmem>>, %arg4: memref<1x128xf32, #tpu.memory_space<vmem>>, %arg5: memref<128x128xbf16, #tpu.memory_space<vmem>>, %arg6: memref<1x128xf32, #tpu.memory_space<vmem>>, %arg7: memref<32x128xf32, #tpu.memory_space<vmem>>, %arg8: memref<32x128xf32, #tpu.memory_space<vmem>>) attributes {dimension_semantics = [#tpu.dimension_semantics<parallel>, #tpu.dimension_semantics<arbitrary>], iteration_bounds = array<i64: 1, 1>, scalar_prefetch = 0 : i64, scratch_operands = 1 : i64, tpu.core_type = #tpu.core_type<tc>, window_params = [{transform_indices = @transform_0, window_bounds = array<i64: 32, 128>}, {transform_indices = @transform_1, window_bounds = array<i64: 128, 128>}, {transform_indices = @transform_2, window_bounds = array<i64: 1, 128>}, {transform_indices = @transform_3, window_bounds = array<i64: 128, 128>}, {pipeline_mode = #tpu.pipeline_mode<synchronous>, transform_indices = @transform_4, window_bounds = array<i64: 1, 128>}, {transform_indices = @transform_5, window_bounds = array<i64: 32, 128>}]} {
    %c0_i32 = arith.constant 0 : i32
    %0 = arith.cmpi eq, %arg1, %c0_i32 : i32
    %1 = arith.extui %0 : i1 to i32
    %c0_i32_0 = arith.constant 0 : i32
    %2 = arith.cmpi ne, %1, %c0_i32_0 : i32
    scf.if %2 {
      %cst_18 = arith.constant 0.000000e+00 : f32
      %31 = vector.broadcast %cst_18 : f32 to vector<32x128xf32>
      %c0_19 = arith.constant 0 : index
      %c0_20 = arith.constant 0 : index
      %32 = vector.load %arg8[%c0_19, %c0_20] : memref<32x128xf32, #tpu.memory_space<vmem>>, vector<32x128xf32>
      tpu.vector_store %arg8[%c0_19, %c0_20], %31 {strides = array<i32>} : memref<32x128xf32, #tpu.memory_space<vmem>>, vector<32x128xf32>,
    } else {
    }
    %c0 = arith.constant 0 : index
    %c0_1 = arith.constant 0 : index
    %3 = vector.load %arg2[%c0, %c0_1] : memref<32x128xf32, #tpu.memory_space<vmem>>, vector<32x128xf32>
    %4 = arith.truncf %3 : vector<32x128xf32> to vector<32x128xbf16>
    %c0_2 = arith.constant 0 : index
    %c0_3 = arith.constant 0 : index
    %5 = vector.load %arg3[%c0_2, %c0_3] : memref<128x128xbf16, #tpu.memory_space<vmem>>, vector<128x128xbf16>
    %cst = arith.constant dense<0.000000e+00> : vector<32x128xf32>
    %6 = tpu.matmul %4, %5, %cst {dimension_numbers = #tpu.dot_dimension_numbers<[1], [0], [0], [1], [0, 0, 1, 1], [], []>} : vector<32x128xbf16>, vector<128x128xbf16>, vector<32x128xf32> -> vector<32x128xf32>
    %c0_4 = arith.constant 0 : index
    %c0_5 = arith.constant 0 : index
    %7 = vector.load %arg4[%c0_4, %c0_5] : memref<1x128xf32, #tpu.memory_space<vmem>>, vector<1x128xf32>
    %8 = vector.broadcast %7 : vector<1x128xf32> to vector<32x128xf32>
    %9 = arith.addf %6, %8 : vector<32x128xf32>
    %10 = arith.mulf %9, %9 : vector<32x128xf32>
    %cst_6 = arith.constant 0.0713548139 : f32
    %11 = vector.broadcast %cst_6 : f32 to vector<32x128xf32>
    %12 = arith.mulf %11, %10 : vector<32x128xf32>
    %cst_7 = arith.constant 1.59576917 : f32
    %13 = vector.broadcast %cst_7 : f32 to vector<32x128xf32>
    %14 = arith.addf %13, %12 : vector<32x128xf32>
    %15 = arith.mulf %9, %14 : vector<32x128xf32>
    %16 = arith.negf %15 : vector<32x128xf32>
    %17 = math.exp %16 : vector<32x128xf32>
    %cst_8 = arith.constant 1.000000e+00 : f32
    %18 = vector.broadcast %cst_8 : f32 to vector<32x128xf32>
    %19 = arith.addf %18, %17 : vector<32x128xf32>
    %20 = arith.divf %18, %19 : vector<32x128xf32>
    %21 = arith.mulf %9, %20 : vector<32x128xf32>
    %c0_9 = arith.constant 0 : index
    %c0_10 = arith.constant 0 : index
    %22 = vector.load %arg8[%c0_9, %c0_10] : memref<32x128xf32, #tpu.memory_space<vmem>>, vector<32x128xf32>
    %23 = arith.truncf %21 : vector<32x128xf32> to vector<32x128xbf16>
    %c0_11 = arith.constant 0 : index
    %c0_12 = arith.constant 0 : index
    %24 = vector.load %arg5[%c0_11, %c0_12] : memref<128x128xbf16, #tpu.memory_space<vmem>>, vector<128x128xbf16>
    %cst_13 = arith.constant dense<0.000000e+00> : vector<32x128xf32>
    %25 = tpu.matmul %23, %24, %cst_13 {dimension_numbers = #tpu.dot_dimension_numbers<[1], [0], [0], [1], [0, 0, 1, 1], [], []>} : vector<32x128xbf16>, vector<128x128xbf16>, vector<32x128xf32> -> vector<32x128xf32>
    %26 = arith.addf %22, %25 : vector<32x128xf32>
    %c0_14 = arith.constant 0 : index
    %c0_15 = arith.constant 0 : index
    %27 = vector.load %arg8[%c0_14, %c0_15] : memref<32x128xf32, #tpu.memory_space<vmem>>, vector<32x128xf32>
    tpu.vector_store %arg8[%c0_14, %c0_15], %26 {strides = array<i32>} : memref<32x128xf32, #tpu.memory_space<vmem>>, vector<32x128xf32>,
    %c0_i32_16 = arith.constant 0 : i32
    %28 = arith.cmpi eq, %arg1, %c0_i32_16 : i32
    %29 = arith.extui %28 : i1 to i32
    %c0_i32_17 = arith.constant 0 : i32
    %30 = arith.cmpi ne, %29, %c0_i32_17 : i32
    scf.if %30 {
      %c0_18 = arith.constant 0 : index
      %c0_19 = arith.constant 0 : index
      %31 = vector.load %arg8[%c0_18, %c0_19] : memref<32x128xf32, #tpu.memory_space<vmem>>, vector<32x128xf32>
      %c0_20 = arith.constant 0 : index
      %c0_21 = arith.constant 0 : index
      %32 = vector.load %arg6[%c0_20, %c0_21] : memref<1x128xf32, #tpu.memory_space<vmem>>, vector<1x128xf32>
      %33 = vector.broadcast %32 : vector<1x128xf32> to vector<32x128xf32>
      %34 = arith.addf %31, %33 : vector<32x128xf32>
      %c0_22 = arith.constant 0 : index
      %c0_23 = arith.constant 0 : index
      %35 = vector.load %arg7[%c0_22, %c0_23] : memref<32x128xf32, #tpu.memory_space<vmem>>, vector<32x128xf32>
      tpu.vector_store %arg7[%c0_22, %c0_23], %34 {strides = array<i32>} : memref<32x128xf32, #tpu.memory_space<vmem>>, vector<32x128xf32>,
    } else {
    }
    return
  }
  func.func @transform_0(%arg0: i32, %arg1: i32) -> (i32, i32) {
    %c0_i32 = arith.constant 0 : i32
    %c0_i32_0 = arith.constant 0 : i32
    return %arg0, %c0_i32 : i32, i32
  }
  func.func @transform_1(%arg0: i32, %arg1: i32) -> (i32, i32) {
    %c0_i32 = arith.constant 0 : i32
    %c0_i32_0 = arith.constant 0 : i32
    return %c0_i32, %arg1 : i32, i32
  }
  func.func @transform_2(%arg0: i32, %arg1: i32) -> (i32, i32) {
    %c0_i32 = arith.constant 0 : i32
    %c0_i32_0 = arith.constant 0 : i32
    return %c0_i32, %arg1 : i32, i32
  }
  func.func @transform_3(%arg0: i32, %arg1: i32) -> (i32, i32) {
    %c0_i32 = arith.constant 0 : i32
    %c0_i32_0 = arith.constant 0 : i32
    return %arg1, %c0_i32 : i32, i32
  }
  func.func @transform_4(%arg0: i32, %arg1: i32) -> (i32, i32) {
    %c0_i32 = arith.constant 0 : i32
    %c0_i32_0 = arith.constant 0 : i32
    %c0_i32_1 = arith.constant 0 : i32
    return %c0_i32, %c0_i32_0 : i32, i32
  }
  func.func @transform_5(%arg0: i32, %arg1: i32) -> (i32, i32) {
    %c0_i32 = arith.constant 0 : i32
    %c0_i32_0 = arith.constant 0 : i32
    return %arg0, %c0_i32 : i32, i32
  }
}

</mosaic_0001>

<llo_original>
// kernel: mlp_forward.1
$region0: #{mlp_forward.1}
  #allocation0 [shape = 'u32[]', space=smem, size = 0x4, offset = 0x4, fixed_abs, tag = 'smem constant byte address 0x4 - core index']
  #allocation1 [shape = 'u32[72,128]{1,0:T(1,128)}', space=vmem, size = 0x9000, scoped, tag = 'internal scratch']
  #allocation2 [shape = 'f32[32,128]{1,0:T(8,128)}', space=vmem, size = 0x4000, scoped, tag = 'scratch operand']
  %s0 = inlined_call_operand.vmem [shape: f32[32,128], index: 0, kind: input, shape index: {}]
  %s1 = inlined_call_operand.vmem [shape: bf16[128,128], index: 1, kind: input, shape index: {}]
  %s2 = inlined_call_operand.vmem [shape: f32[1,128], index: 2, kind: input, shape index: {}]
  %s3 = inlined_call_operand.hbm [shape: bf16[128,128], index: 3, kind: input, shape index: {}]
  %s4 = inlined_call_operand.vmem [shape: f32[1,128], index: 4, kind: input, shape index: {}]
  %s5 = inlined_call_operand.hbm [shape: f32[32,128], index: 5, kind: output, shape index: {}]
  %s6 = sld [smem:[#allocation0]]
  $region42: #{mlp_forward.1} parent=0
    _
  %s8 = ssub.s32 1, %s6
  %s9 = scalar_select 0, %s8, %s6
  $region1: #{mlp_forward.1} parent=0
    #allocation3 [shape = 'u8[32768]{0}', space=vmem, size = 0x8000, scoped, tag = 'input window, operand 3, single buffered']
    #allocation4 [shape = 's32[1]{0}', space=sflag, size = 0x4, scoped, tag = 'scoped memory for mlp_forward.1']
    #allocation5 [shape = 's32[1]{0}', space=sflag, size = 0x4, scoped, tag = 'scoped memory for mlp_forward.1']
    #allocation6 [shape = 'u8[16384]{0}', space=vmem, size = 0x4000, scoped, tag = 'output window, operand 0, single buffered']
    %10 = vsyncpa [#allocation4], 0
    %11 = vsyncpa [#allocation5], 0
    // Predicated region
    $region2: #{mlp_forward.1} parent=1 // pred_check
      _
    $region3: #{mlp_forward.1} parent=1 // pred_check_branch
      %13 = sbr.rel (0) target = $region5
    $region4: #{mlp_forward.1} parent=1 // pred_region
      _
    $region5: #{mlp_forward.1} parent=1 // pred_fallthru
      _
    // Predicated region
    $region6: #{mlp_forward.1} parent=1 // pred_check
      _
    $region7: #{mlp_forward.1} parent=1 // pred_check_branch
      %15 = sbr.rel (0) target = $region9
    $region8: #{mlp_forward.1} parent=1 // pred_region
      _
    $region9: #{mlp_forward.1} parent=1 // pred_fallthru
      _
    // Predicated region
    $region10: #{mlp_forward.1} parent=1 // pred_check
      _
    $region11: #{mlp_forward.1} parent=1 // pred_check_branch
      %17 = sbr.rel (0) target = $region13
    $region12: #{mlp_forward.1} parent=1 // pred_region
      _
    $region13: #{mlp_forward.1} parent=1 // pred_fallthru
      _
    // Predicated region
    $region14: #{mlp_forward.1} parent=1 // pred_check
      _
    $region15: #{mlp_forward.1} parent=1 // pred_check_branch
      %19 = sbr.rel (0) target = $region17
    $region16: #{mlp_forward.1} parent=1 // pred_region
      %21 = vsyncadd [#allocation4], 0
      %s22 = sshll.u32 %s3, 4
      %s23 = int_to_ptr.hbm [resolvable:$true] %s22
      %s24 = sshll.u32 [#allocation3], 4
      %s25 = int_to_ptr.vmem [resolvable:$true] %s24
      %30 = dma.hbm_to_vmem [thread:$0]  %s23, 1024, %s25, [#allocation4], 64, 64, 4
    $region17: #{mlp_forward.1} parent=1 // pred_fallthru
      _
    // Predicated region
    $region18: #{mlp_forward.1} parent=1 // pred_check
      _
    $region19: #{mlp_forward.1} parent=1 // pred_check_branch
      %32 = sbr.rel (0) target = $region21
    $region20: #{mlp_forward.1} parent=1 // pred_region
      _
    $region21: #{mlp_forward.1} parent=1 // pred_fallthru
      _
    // Predicated region
    $region22: #{mlp_forward.1} parent=1 // pred_check
      _
    $region23: #{mlp_forward.1} parent=1 // pred_check_branch
      %34 = sbr.rel (0) target = $region25
    $region24: #{mlp_forward.1} parent=1 // pred_region
      %36 = dma.done [#allocation4], 1024
    $region25: #{mlp_forward.1} parent=1 // pred_fallthru
      _
    %p37 = scmp.eq.s32.totalorder 0, 0
    // Predicated region
    $region26: #{mlp_forward.1} parent=1 // pred_check
      %p38 = pneg %p37
    $region27: #{mlp_forward.1} parent=1 // pred_check_branch
      %40 = sbr.rel (%p38) target = $region29
    $region28: #{mlp_forward.1} parent=1 // pred_region
      %41 = vst [vmem:[#allocation2] sm:$0xff] 0.0
      %42 = vst [vmem:[#allocation2 + $0x8] sm:$0xff] 0.0
      %43 = vst [vmem:[#allocation2 + $0x10] sm:$0xff] 0.0
      %44 = vst [vmem:[#allocation2 + $0x18] sm:$0xff] 0.0
    $region29: #{mlp_forward.1} parent=1 // pred_fallthru
      _
    %v45 = vld [vmem:[%s0] sm:$0xff]
    %v46 = vld [vmem:[%s0 + $0x8] sm:$0xff]
    %v47 = vld [vmem:[%s0 + $0x10] sm:$0xff]
    %v48 = vld [vmem:[%s0 + $0x18] sm:$0xff]
    %v49 = vpack.c.bf16 %v46, %v45
    %v50 = vpack.c.bf16 %v48, %v47
    %v51 = vld [vmem:[%s1] sm:$0xf]
    %v52 = vld [vmem:[%s1 + $0x4] sm:$0xf]
    %v53 = vld [vmem:[%s1 + $0x8] sm:$0xf]
    %v54 = vld [vmem:[%s1 + $0xc] sm:$0xf]
    %v55 = vld [vmem:[%s1 + $0x10] sm:$0xf]
    %v56 = vld [vmem:[%s1 + $0x14] sm:$0xf]
    %v57 = vld [vmem:[%s1 + $0x18] sm:$0xf]
    %v58 = vld [vmem:[%s1 + $0x1c] sm:$0xf]
    %v59 = vld [vmem:[%s1 + $0x20] sm:$0xf]
    %v60 = vld [vmem:[%s1 + $0x24] sm:$0xf]
    %v61 = vld [vmem:[%s1 + $0x28] sm:$0xf]
    %v62 = vld [vmem:[%s1 + $0x2c] sm:$0xf]
    %v63 = vld [vmem:[%s1 + $0x30] sm:$0xf]
    %v64 = vld [vmem:[%s1 + $0x34] sm:$0xf]
    %v65 = vld [vmem:[%s1 + $0x38] sm:$0xf]
    %v66 = vld [vmem:[%s1 + $0x3c] sm:$0xf]
    %v67 = vld [vmem:[%s2] sm:$0x1]
    %v69 = vperm.slane %v67, 0
    %v87 = vunpack.c.l.b16 %v51
    %v88 = vunpack.c.l.b16 %v52
    %v89 = vunpack.c.l.b16 %v53
    %v90 = vunpack.c.l.b16 %v54
    %v91 = vunpack.c.l.b16 %v55
    %v92 = vunpack.c.l.b16 %v56
    %v93 = vunpack.c.l.b16 %v57
    %v94 = vunpack.c.l.b16 %v58
    %v95 = vunpack.c.l.b16 %v59
    %v96 = vunpack.c.l.b16 %v60
    %v97 = vunpack.c.l.b16 %v61
    %v98 = vunpack.c.l.b16 %v62
    %v99 = vunpack.c.l.b16 %v63
    %v100 = vunpack.c.l.b16 %v64
    %v101 = vunpack.c.l.b16 %v65
    %v102 = vunpack.c.l.b16 %v66
    %v103 = vpack.c.b16 %v88, %v87
    %v104 = vpack.c.b16 %v90, %v89
    %v105 = vpack.c.b16 %v92, %v91
    %v106 = vpack.c.b16 %v94, %v93
    %v107 = vpack.c.b16 %v96, %v95
    %v108 = vpack.c.b16 %v98, %v97
    %v109 = vpack.c.b16 %v100, %v99
    %v110 = vpack.c.b16 %v102, %v101
    %119 = vmatpush.bf16.msra.mxu0 %v110
    %120 = vmatpush.bf16.msra.mxu0 %v109
    %121 = vmatpush.bf16.msra.mxu0 %v108
    %122 = vmatpush.bf16.msra.mxu0 %v107
    %123 = vmatpush.bf16.msra.mxu0 %v106
    %124 = vmatpush.bf16.msra.mxu0 %v105
    %125 = vmatpush.bf16.msra.mxu0 %v104
    %126 = vmatpush.bf16.msra.mxu0 %v103
    %127 = vmatmul.bf16.gmra.mxu0 %v49
    %v128 = vpop.f32.mrf.mxu0
    %v129 = vadd.f32 %v69, %v128
    %v130 = vpop.f32.mrf.mxu0
    %v131 = vadd.f32 %v69, %v130
    %132 = vmatmul.bf16.gmra.mxu0 %v50
    %v133 = vpop.f32.mrf.mxu0
    %v134 = vadd.f32 %v69, %v133
    %v135 = vpop.f32.mrf.mxu0
    %v136 = vadd.f32 %v69, %v135
    %137 = vdwg.mxu0
    %v138 = vmul.f32 %v129, %v129
    %v139 = vmul.f32 %v131, %v131
    %v140 = vmul.f32 %v134, %v134
    %v141 = vmul.f32 %v136, %v136
    %v142 = vmul.f32 %v138, 0.071354814
    %v143 = vmul.f32 %v139, 0.071354814
    %v144 = vmul.f32 %v140, 0.071354814
    %v145 = vmul.f32 %v141, 0.071354814
    %v146 = vadd.f32 %v142, 1.5957692
    %v147 = vadd.f32 %v143, 1.5957692
    %v148 = vadd.f32 %v144, 1.5957692
    %v149 = vadd.f32 %v145, 1.5957692
    %v150 = vmul.f32 %v129, %v146
    %v151 = vmul.f32 %v131, %v147
    %v152 = vmul.f32 %v134, %v148
    %v153 = vmul.f32 %v136, %v149
    %v154 = vxor.u32 %v150, 2147483648
    %v155 = vxor.u32 %v151, 2147483648
    %v156 = vxor.u32 %v152, 2147483648
    %v157 = vxor.u32 %v153, 2147483648
    %v158 = vmul.f32 %v154, 1.442695
    %v159 = vpow.pop %v158
    %v160 = vmul.f32 %v155, 1.442695
    %v161 = vpow.pop %v160
    %v162 = vmul.f32 %v156, 1.442695
    %v163 = vpow.pop %v162
    %v164 = vmul.f32 %v157, 1.442695
    %v165 = vpow.pop %v164
    %v166 = vadd.f32 %v159, 1.0
    %v167 = vadd.f32 %v161, 1.0
    %v168 = vadd.f32 %v163, 1.0
    %v169 = vadd.f32 %v165, 1.0
    %v170 = vrcp.pop %v166
    %v171 = vmul.f32 %v166, %v170
    %v172 = vsub.f32 1.0, %v171
    %v173 = vmul.f32 %v170, %v172
    %v174 = vadd.f32 %v170, %v173
    %vm175 = vweird.f32 %v166
    %vm176 = vweird.f32 %v170
    %vm177 = vmor %vm175, %vm176
    %v178 = vsel %vm177, %v170, %v174
    %v179 = vand.u32 2147483647, %v166
    %vm180 = vcmp.eq.f32.partialorder %v179, 8.507059e+37
    %v181 = vand.u32 %v166, 2147483648
    %v182 = vor.u32 1.1754944e-38, %v181
    %v183 = vsel %vm180, %v182, %v178
    %v184 = vmul.f32 1.0, %v183
    %v185 = vrcp.pop %v167
    %v186 = vmul.f32 %v167, %v185
    %v187 = vsub.f32 1.0, %v186
    %v188 = vmul.f32 %v185, %v187
    %v189 = vadd.f32 %v185, %v188
    %vm190 = vweird.f32 %v167
    %vm191 = vweird.f32 %v185
    %vm192 = vmor %vm190, %vm191
    %v193 = vsel %vm192, %v185, %v189
    %v194 = vand.u32 2147483647, %v167
    %vm195 = vcmp.eq.f32.partialorder %v194, 8.507059e+37
    %v196 = vand.u32 %v167, 2147483648
    %v197 = vor.u32 1.1754944e-38, %v196
    %v198 = vsel %vm195, %v197, %v193
    %v199 = vmul.f32 1.0, %v198
    %v200 = vrcp.pop %v168
    %v201 = vmul.f32 %v168, %v200
    %v202 = vsub.f32 1.0, %v201
    %v203 = vmul.f32 %v200, %v202
    %v204 = vadd.f32 %v200, %v203
    %vm205 = vweird.f32 %v168
    %vm206 = vweird.f32 %v200
    %vm207 = vmor %vm205, %vm206
    %v208 = vsel %vm207, %v200, %v204
    %v209 = vand.u32 2147483647, %v168
    %vm210 = vcmp.eq.f32.partialorder %v209, 8.507059e+37
    %v211 = vand.u32 %v168, 2147483648
    %v212 = vor.u32 1.1754944e-38, %v211
    %v213 = vsel %vm210, %v212, %v208
    %v214 = vmul.f32 1.0, %v213
    %v215 = vrcp.pop %v169
    %v216 = vmul.f32 %v169, %v215
    %v217 = vsub.f32 1.0, %v216
    %v218 = vmul.f32 %v215, %v217
    %v219 = vadd.f32 %v215, %v218
    %vm220 = vweird.f32 %v169
    %vm221 = vweird.f32 %v215
    %vm222 = vmor %vm220, %vm221
    %v223 = vsel %vm222, %v215, %v219
    %v224 = vand.u32 2147483647, %v169
    %vm225 = vcmp.eq.f32.partialorder %v224, 8.507059e+37
    %v226 = vand.u32 %v169, 2147483648
    %v227 = vor.u32 1.1754944e-38, %v226
    %v228 = vsel %vm225, %v227, %v223
    %v229 = vmul.f32 1.0, %v228
    %v230 = vmul.f32 %v129, %v184
    %v231 = vmul.f32 %v131, %v199
    %v232 = vmul.f32 %v134, %v214
    %v233 = vmul.f32 %v136, %v229
    %v234 = vld [vmem:[#allocation2] sm:$0xff]
    %v235 = vld [vmem:[#allocation2 + $0x8] sm:$0xff]
    %v236 = vld [vmem:[#allocation2 + $0x10] sm:$0xff]
    %v237 = vld [vmem:[#allocation2 + $0x18] sm:$0xff]
    %v238 = vpack.c.bf16 %v231, %v230
    %v239 = vpack.c.bf16 %v233, %v232
    %v240 = vld [vmem:[#allocation3] sm:$0xf]
    %v241 = vld [vmem:[#allocation3 + $0x4] sm:$0xf]
    %v242 = vld [vmem:[#allocation3 + $0x8] sm:$0xf]
    %v243 = vld [vmem:[#allocation3 + $0xc] sm:$0xf]
    %v244 = vld [vmem:[#allocation3 + $0x10] sm:$0xf]
    %v245 = vld [vmem:[#allocation3 + $0x14] sm:$0xf]
    %v246 = vld [vmem:[#allocation3 + $0x18] sm:$0xf]
    %v247 = vld [vmem:[#allocation3 + $0x1c] sm:$0xf]
    %v248 = vld [vmem:[#allocation3 + $0x20] sm:$0xf]
    %v249 = vld [vmem:[#allocation3 + $0x24] sm:$0xf]
    %v250 = vld [vmem:[#allocation3 + $0x28] sm:$0xf]
    %v251 = vld [vmem:[#allocation3 + $0x2c] sm:$0xf]
    %v252 = vld [vmem:[#allocation3 + $0x30] sm:$0xf]
    %v253 = vld [vmem:[#allocation3 + $0x34] sm:$0xf]
    %v254 = vld [vmem:[#allocation3 + $0x38] sm:$0xf]
    %v255 = vld [vmem:[#allocation3 + $0x3c] sm:$0xf]
    %v272 = vunpack.c.l.b16 %v240
    %v273 = vunpack.c.l.b16 %v241
    %v274 = vunpack.c.l.b16 %v242
    %v275 = vunpack.c.l.b16 %v243
    %v276 = vunpack.c.l.b16 %v244
    %v277 = vunpack.c.l.b16 %v245
    %v278 = vunpack.c.l.b16 %v246
    %v279 = vunpack.c.l.b16 %v247
    %v280 = vunpack.c.l.b16 %v248
    %v281 = vunpack.c.l.b16 %v249
    %v282 = vunpack.c.l.b16 %v250
    %v283 = vunpack.c.l.b16 %v251
    %v284 = vunpack.c.l.b16 %v252
    %v285 = vunpack.c.l.b16 %v253
    %v286 = vunpack.c.l.b16 %v254
    %v287 = vunpack.c.l.b16 %v255
    %v288 = vpack.c.b16 %v273, %v272
    %v289 = vpack.c.b16 %v275, %v274
    %v290 = vpack.c.b16 %v277, %v276
    %v291 = vpack.c.b16 %v279, %v278
    %v292 = vpack.c.b16 %v281, %v280
    %v293 = vpack.c.b16 %v283, %v282
    %v294 = vpack.c.b16 %v285, %v284
    %v295 = vpack.c.b16 %v287, %v286
    %304 = vmatpush.bf16.msra.mxu0 %v295
    %305 = vmatpush.bf16.msra.mxu0 %v294
    %306 = vmatpush.bf16.msra.mxu0 %v293
    %307 = vmatpush.bf16.msra.mxu0 %v292
    %308 = vmatpush.bf16.msra.mxu0 %v291
    %309 = vmatpush.bf16.msra.mxu0 %v290
    %310 = vmatpush.bf16.msra.mxu0 %v289
    %311 = vmatpush.bf16.msra.mxu0 %v288
    %312 = vmatmul.bf16.gmra.mxu0 %v238
    %v313 = vpop.f32.mrf.mxu0
    %v314 = vadd.f32 0.0, %v313
    %v315 = vpop.f32.mrf.mxu0
    %v316 = vadd.f32 0.0, %v315
    %317 = vmatmul.bf16.gmra.mxu0 %v239
    %v318 = vpop.f32.mrf.mxu0
    %v319 = vadd.f32 0.0, %v318
    %v320 = vpop.f32.mrf.mxu0
    %v321 = vadd.f32 0.0, %v320
    %322 = vdwg.mxu0
    %v323 = vadd.f32 %v234, %v314
    %v324 = vadd.f32 %v235, %v316
    %v325 = vadd.f32 %v236, %v319
    %v326 = vadd.f32 %v237, %v321
    %327 = vst [vmem:[#allocation2] sm:$0xff] %v323
    %328 = vst [vmem:[#allocation2 + $0x8] sm:$0xff] %v324
    %329 = vst [vmem:[#allocation2 + $0x10] sm:$0xff] %v325
    %330 = vst [vmem:[#allocation2 + $0x18] sm:$0xff] %v326
    // Predicated region
    $region30: #{mlp_forward.1} parent=1 // pred_check
      %p331 = pneg %p37
    $region31: #{mlp_forward.1} parent=1 // pred_check_branch
      %333 = sbr.rel (%p331) target = $region33
    $region32: #{mlp_forward.1} parent=1 // pred_region
      %v334 = vld [vmem:[#allocation2] sm:$0xff]
      %v335 = vld [vmem:[#allocation2 + $0x8] sm:$0xff]
      %v336 = vld [vmem:[#allocation2 + $0x10] sm:$0xff]
      %v337 = vld [vmem:[#allocation2 + $0x18] sm:$0xff]
      %v338 = vld [vmem:[%s4] sm:$0x1]
      %v340 = vperm.slane %v338, 0
      %v342 = vadd.f32 %v334, %v340
      %v343 = vadd.f32 %v335, %v340
      %v344 = vadd.f32 %v336, %v340
      %v345 = vadd.f32 %v337, %v340
      %346 = vst [vmem:[#allocation6] sm:$0xff] %v342
      %347 = vst [vmem:[#allocation6 + $0x8] sm:$0xff] %v343
      %348 = vst [vmem:[#allocation6 + $0x10] sm:$0xff] %v344
      %349 = vst [vmem:[#allocation6 + $0x18] sm:$0xff] %v345
    $region33: #{mlp_forward.1} parent=1 // pred_fallthru
      _
    // Predicated region
    $region34: #{mlp_forward.1} parent=1 // pred_check
      _
    $region35: #{mlp_forward.1} parent=1 // pred_check_branch
      %351 = sbr.rel (0) target = $region37
    $region36: #{mlp_forward.1} parent=1 // pred_region
      %353 = vsyncadd [#allocation5], 0
      %s354 = sshll.u32 [#allocation6], 4
      %s355 = int_to_ptr.vmem [resolvable:$true] %s354
      %s356 = sshll.u32 %s5, 4
      %s357 = int_to_ptr.hbm [resolvable:$true] %s356
      %362 = dma.vmem_to_hbm [thread:$0]  %s355, 512, %s357, [#allocation5], 128, 128, 8
    $region37: #{mlp_forward.1} parent=1 // pred_fallthru
      _
    // Predicated region
    $region38: #{mlp_forward.1} parent=1 // pred_check
      _
    $region39: #{mlp_forward.1} parent=1 // pred_check_branch
      %364 = sbr.rel (0) target = $region41
    $region40: #{mlp_forward.1} parent=1 // pred_region
      %366 = dma.done [#allocation5], 512
    $region41: #{mlp_forward.1} parent=1 // pred_fallthru
      _
    %367 = vsyncpa [#allocation4], 1
    %368 = vsyncpa [#allocation5], 1

</llo_original>
